<compile_context>
chip_gen: v7x
topology: tpu7x:2x2x1
jax: 0.10.0
libtpu: 0.0.40
codegen_flags: <defaults>
</compile_context>

<pallas_src>
import jax
import jax.numpy as jnp
from jax.experimental import pallas as pl
from jax.experimental.pallas import tpu as pltpu


_LANE = 128            # lane-dense last dim
_ROW_TILE = 2048       # (2048, 128) f32 block = 1 MiB; 3 arrays x 2 bufs = 6 MiB resident
_VMEM_LIMIT = 64 * 1024 * 1024   # explicit scoped VMEM; safe on v5e/v6e/v7x


def _round_up(x, m):
    return ((x + m - 1) // m) * m


# ----------------------------------------------------------------------------
# Kernel 1: fused elementwise lerp over a dense 2D slab
#   out = ma + (cur - ma) * w        (torch: ma.lerp_(cur, 1 - decay))
# ----------------------------------------------------------------------------
def _lerp_kernel(w_ref, ma_ref, cur_ref, out_ref):
    w = w_ref[0]                           # scalar lerp weight from SMEM
    ma = ma_ref[...]
    out_ref[...] = ma + (cur_ref[...] - ma) * w


def _fused_lerp(weight, ema_tree, cur_tree):
    """Lerp every leaf of `ema_tree` toward `cur_tree` in a single kernel launch."""
    leaves_ma, treedef = jax.tree_util.tree_flatten(ema_tree)
    leaves_cur = jax.tree_util.tree_leaves(cur_tree)
    sizes = [int(l.size) for l in leaves_ma]
    shapes = [l.shape for l in leaves_ma]
    dtypes = [l.dtype for l in leaves_ma]

    flat_ma = jnp.concatenate([l.reshape(-1).astype(jnp.float32) for l in leaves_ma])
    flat_cur = jnp.concatenate([l.reshape(-1).astype(jnp.float32) for l in leaves_cur])
    n = flat_ma.shape[0]

    # lane- and sublane-dense padded slab: (rows, 128) with rows % row_tile == 0
    rows = _round_up(_round_up(n, _LANE) // _LANE, 8)
    row_tile = min(_ROW_TILE, rows)
    rows = _round_up(rows, row_tile)
    padded = rows * _LANE

    ma2 = jnp.pad(flat_ma, (0, padded - n)).reshape(rows, _LANE)
    cur2 = jnp.pad(flat_cur, (0, padded - n)).reshape(rows, _LANE)
    w = weight.astype(jnp.float32).reshape(1)

    out2 = pl.pallas_call(
        _lerp_kernel,
        out_shape=jax.ShapeDtypeStruct((rows, _LANE), jnp.float32),
        grid=(rows // row_tile,),
        in_specs=[
            pl.BlockSpec(memory_space=pltpu.MemorySpace.SMEM),        # lerp weight
            pl.BlockSpec((row_tile, _LANE), lambda i: (i, 0)),        # ma tile
            pl.BlockSpec((row_tile, _LANE), lambda i: (i, 0)),        # cur tile
        ],
        out_specs=pl.BlockSpec((row_tile, _LANE), lambda i: (i, 0)),
        input_output_aliases={1: 0},                                  # in-place EMA buffer
        compiler_params=pltpu.CompilerParams(
            dimension_semantics=("parallel",),
            vmem_limit_bytes=_VMEM_LIMIT,
        ),
    )(w, ma2, cur2)

    flat_out = out2.reshape(-1)
    new_leaves = []
    off = 0
    for sz, shp, dt in zip(sizes, shapes, dtypes):
        new_leaves.append(flat_out[off:off + sz].reshape(shp).astype(dt))
        off += sz
    return jax.tree_util.tree_unflatten(treedef, new_leaves)


_fused_lerp_jit = jax.jit(_fused_lerp)


# ----------------------------------------------------------------------------
# Kernel 2: shadowed model forward — Linear layer, tiled MXU matmul
#   y = x @ W + b     x: (B, D_in), W: (D_in, D_out), b: (D_out,)
# ----------------------------------------------------------------------------
def _linear_kernel(x_ref, w_ref, b_ref, o_ref, acc_ref):
    k = pl.program_id(2)

    @pl.when(k == 0)
    def _():
        acc_ref[...] = jnp.zeros_like(acc_ref)

    acc_ref[...] += jnp.dot(x_ref[...], w_ref[...],
                            preferred_element_type=jnp.float32)

    @pl.when(k == pl.num_programs(2) - 1)
    def _():
        o_ref[...] = (acc_ref[...] + b_ref[...]).astype(o_ref.dtype)


def _linear_forward(x, w, b, tm=128, tn=256, tk=256):
    M, K = x.shape
    _, N = w.shape

    # pad to sublane/lane-dense, tile-divisible shapes
    Mp = _round_up(M, 8)
    tm = min(tm, Mp)
    Mp = _round_up(Mp, tm)
    Np = _round_up(N, 128)
    tn = min(tn, Np)
    Np = _round_up(Np, tn)
    Kp = _round_up(K, 128)
    tk = min(tk, Kp)
    Kp = _round_up(Kp, tk)

    xp = jnp.pad(x.astype(jnp.float32), ((0, Mp - M), (0, Kp - K)))
    wp = jnp.pad(w.astype(jnp.float32), ((0, Kp - K), (0, Np - N)))
    bp = jnp.pad(b.astype(jnp.float32).reshape(1, -1), ((0, 0), (0, Np - N)))

    out = pl.pallas_call(
        _linear_kernel,
        out_shape=jax.ShapeDtypeStruct((Mp, Np), jnp.float32),
        grid=(Mp // tm, Np // tn, Kp // tk),
        in_specs=[
            pl.BlockSpec((tm, tk), lambda i, j, k: (i, k)),
            pl.BlockSpec((tk, tn), lambda i, j, k: (k, j)),
            pl.BlockSpec((1, tn), lambda i, j, k: (0, j)),
        ],
        out_specs=pl.BlockSpec((tm, tn), lambda i, j, k: (i, j)),
        scratch_shapes=[pltpu.VMEM((tm, tn), jnp.float32)],
        compiler_params=pltpu.CompilerParams(
            dimension_semantics=("parallel", "parallel", "arbitrary"),
            vmem_limit_bytes=_VMEM_LIMIT,
        ),
    )(xp, wp, bp)
    return out[:M, :N].astype(x.dtype)


linear_forward = jax.jit(_linear_forward, static_argnames=("tm", "tn", "tk"))


# ----------------------------------------------------------------------------
# EMA bookkeeping (mirrors the torch module's scalar logic exactly)
# ----------------------------------------------------------------------------
def _clamp(value, min_value=None, max_value=None):
    assert (min_value is not None) or (max_value is not None)
    if min_value is not None:
        value = max(value, min_value)
    if max_value is not None:
        value = min(value, max_value)
    return value


class EMA:
    # TODO(synk): named buffers vs parameters are not distinguished — a single
    # param dict stands in for both iterators of the torch module.
    def __init__(self, params, beta=0.9999, update_after_step=100,
                 update_every=10, inv_gamma=1.0, power=2.0 / 3.0, min_value=0.0,
                 param_or_buffer_names_no_ema=(), ignore_names=(),
                 ignore_startswith_names=()):
        self.beta = beta
        self.update_after_step = update_after_step
        self.update_every = update_every
        self.inv_gamma = inv_gamma
        self.power = power
        self.min_value = min_value
        self.param_or_buffer_names_no_ema = set(param_or_buffer_names_no_ema)
        self.ignore_names = set(ignore_names)
        self.ignore_startswith_names = set(ignore_startswith_names)
        # online model parameters (dict of name -> array)
        self.online = dict(params)
        # ema_model = deepcopy(model)
        self.ema = {k: jnp.asarray(v) for k, v in params.items()}
        self.initted = False
        self.step = 0

    def copy_params_from_model_to_ema(self):
        self.ema = {k: jnp.asarray(v) for k, v in self.online.items()}

    def get_current_decay(self):
        epoch = _clamp(self.step - self.update_after_step - 1, min_value=0.0)
        value = 1 - (1 + epoch / self.inv_gamma) ** (-self.power)
        if epoch <= 0:
            return 0.0
        return _clamp(value, min_value=self.min_value, max_value=self.beta)

    def update(self):
        step = self.step
        self.step += 1
        if step % self.update_every != 0:
            return
        if step <= self.update_after_step:
            self.copy_params_from_model_to_ema()
            return
        if not self.initted:
            self.copy_params_from_model_to_ema()
            self.initted = True
        self.update_moving_average()

    def update_moving_average(self):
        current_decay = self.get_current_decay()
        weight = 1.0 - current_decay
        new_ema = dict(self.ema)
        lerp_ema, lerp_cur = {}, {}
        for name, cur in self.online.items():
            if name in self.ignore_names:
                continue
            if any(name.startswith(p) for p in self.ignore_startswith_names):
                continue
            if name in self.param_or_buffer_names_no_ema:
                new_ema[name] = jnp.asarray(cur)    # copy_, no EMA
                continue
            lerp_ema[name] = self.ema[name]
            lerp_cur[name] = cur
        if lerp_ema:
            updated = _fused_lerp_jit(jnp.float32(weight), lerp_ema, lerp_cur)
            new_ema.update(updated)
        self.ema = new_ema

    def forward(self, x):
        # forward(*args) == self.ema_model(*args): run the shadow Linear layer.
        return linear_forward(x, self.ema["weight"], self.ema["bias"])


# ----------------------------------------------------------------------------
if __name__ == "__main__":
    key = jax.random.PRNGKey(0)
    k_w, k_b, k_x, k_t1, k_t2, k_t3, k_t4 = jax.random.split(key, 7)

    # --- direct correctness check of the fused lerp kernel ---
    t_ma = {"a": jax.random.normal(k_t1, (37, 53), dtype=jnp.float32),
            "b": jax.random.normal(k_t2, (19,), dtype=jnp.float32)}
    t_cur = {"a": jax.random.normal(k_t3, (37, 53), dtype=jnp.float32),
             "b": jax.random.normal(k_t4, (19,), dtype=jnp.float32)}
    t_out = _fused_lerp_jit(jnp.float32(0.37), t_ma, t_cur)
    for name in t_ma:
        ref = t_ma[name] + (t_cur[name] - t_ma[name]) * 0.37
        assert jnp.allclose(t_out[name], ref, atol=1e-6), f"lerp mismatch: {name}"

    # --- end-to-end EMA run with a small Linear shadow model ---
    B, D_in, D_out = 2, 32, 16
    W = jax.random.normal(k_w, (D_in, D_out), dtype=jnp.float32) * 0.1
    b = jax.random.normal(k_b, (D_out,), dtype=jnp.float32) * 0.1

    ema = EMA({"weight": W, "bias": b})

    # simulate a short training run: online params drift, EMA tracks them
    for _ in range(150):
        ema.online = {
            "weight": ema.online["weight"] * 0.999 + 0.001,
            "bias": ema.online["bias"] * 0.999 + 0.001,
        }
        ema.update()

    # forward pass through the EMA-shadowed model (tiled Pallas matmul kernel)
    x = jax.random.normal(k_x, (B, D_in), dtype=jnp.float32)
    y = ema.forward(x)
    y = jax.block_until_ready(y)

    # sanity check against a pure-JAX reference of the same EMA params
    ref = x @ ema.ema["weight"] + ema.ema["bias"][None, :]
    assert jnp.allclose(y, ref, atol=1e-5), "forward mismatch vs reference"

    print("KERNEL_OK")
</pallas_src>

<mosaic_0001>
module attributes {stable_mosaic.version = 11 : i64} {
  func.func @_lerp_kernel(%arg0: i32, %arg1: memref<1xf32, #tpu.memory_space<smem>>, %arg2: memref<16x128xf32, #tpu.memory_space<vmem>>, %arg3: memref<16x128xf32, #tpu.memory_space<vmem>>, %arg4: memref<16x128xf32, #tpu.memory_space<vmem>>) attributes {dimension_semantics = [#tpu.dimension_semantics<parallel>], iteration_bounds = array<i64: 1>, scalar_prefetch = 0 : i64, scratch_operands = 0 : i64, tpu.core_type = #tpu.core_type<tc>, window_params = [{transform_indices = @transform_0, window_bounds = array<i64: 1>}, {transform_indices = @transform_1, window_bounds = array<i64: 16, 128>}, {transform_indices = @transform_2, window_bounds = array<i64: 16, 128>}, {transform_indices = @transform_3, window_bounds = array<i64: 16, 128>}]} {
    %c0 = arith.constant 0 : index
    %0 = memref.load %arg1[%c0] : memref<1xf32, #tpu.memory_space<smem>>
    %c0_0 = arith.constant 0 : index
    %c0_1 = arith.constant 0 : index
    %1 = vector.load %arg2[%c0_0, %c0_1] : memref<16x128xf32, #tpu.memory_space<vmem>>, vector<16x128xf32>
    %c0_2 = arith.constant 0 : index
    %c0_3 = arith.constant 0 : index
    %2 = vector.load %arg3[%c0_2, %c0_3] : memref<16x128xf32, #tpu.memory_space<vmem>>, vector<16x128xf32>
    %3 = arith.subf %2, %1 : vector<16x128xf32>
    %4 = vector.broadcast %0 : f32 to vector<16x128xf32>
    %5 = arith.mulf %3, %4 : vector<16x128xf32>
    %6 = arith.addf %1, %5 : vector<16x128xf32>
    %c0_4 = arith.constant 0 : index
    %c0_5 = arith.constant 0 : index
    %7 = vector.load %arg4[%c0_4, %c0_5] : memref<16x128xf32, #tpu.memory_space<vmem>>, vector<16x128xf32>
    tpu.vector_store %arg4[%c0_4, %c0_5], %6 {strides = array<i32>} : memref<16x128xf32, #tpu.memory_space<vmem>>, vector<16x128xf32>,
    return
  }
  func.func @transform_0(%arg0: i32) -> i32 {
    %c0_i32 = arith.constant 0 : i32
    %c0_i32_0 = arith.constant 0 : i32
    return %c0_i32 : i32
  }
  func.func @transform_1(%arg0: i32) -> (i32, i32) {
    %c0_i32 = arith.constant 0 : i32
    %c0_i32_0 = arith.constant 0 : i32
    return %arg0, %c0_i32 : i32, i32
  }
  func.func @transform_2(%arg0: i32) -> (i32, i32) {
    %c0_i32 = arith.constant 0 : i32
    %c0_i32_0 = arith.constant 0 : i32
    return %arg0, %c0_i32 : i32, i32
  }
  func.func @transform_3(%arg0: i32) -> (i32, i32) {
    %c0_i32 = arith.constant 0 : i32
    %c0_i32_0 = arith.constant 0 : i32
    return %arg0, %c0_i32 : i32, i32
  }
}

</mosaic_0001>

<llo_original>
// kernel: _fused_lerp.1
$region0: #{_fused_lerp.1}
  #allocation0 [shape = 'u32[]', space=smem, size = 0x4, offset = 0x4, fixed_abs, tag = 'smem constant byte address 0x4 - core index']
  #allocation1 [shape = 'u32[144,128]{1,0:T(1,128)}', space=vmem, size = 0x12000, scoped, tag = 'internal scratch']
  #allocation2 [shape = 'f32[1]{0:T(128)S(6)}', space=smem, size = 0x200, scoped, tag = 'scoped memory for _fused_lerp.1']
  %s0 = inlined_call_operand.<no memory space> [shape: f32[1], index: 0, kind: input, shape index: {}]
  %s1 = inlined_call_operand.hbm [shape: f32[16,128], index: 1, kind: input, shape index: {}, may-alias: {1,3}]
  %s2 = inlined_call_operand.hbm [shape: f32[16,128], index: 2, kind: input, shape index: {}]
  %s3 = inlined_call_operand.hbm [shape: f32[16,128], index: 3, kind: output, shape index: {}, may-alias: {1,3}]
  %s4 = sld [smem:[#allocation0]]
  $region30: #{_fused_lerp.1} parent=0
    _
  %s6 = ssub.s32 1, %s4
  %s7 = scalar_select 0, %s6, %s4
  %8 = sst [smem:[#allocation2]] %s0
  $region1: #{_fused_lerp.1} parent=0
    #allocation3 [shape = 'u8[8192]{0}', space=vmem, size = 0x2000, scoped, tag = 'input window, operand 1, single buffered']
    #allocation4 [shape = 's32[1]{0}', space=sflag, size = 0x4, scoped, tag = 'scoped memory for _fused_lerp.1']
    #allocation5 [shape = 's32[1]{0}', space=sflag, size = 0x4, scoped, tag = 'scoped memory for _fused_lerp.1']
    #allocation6 [shape = 'u8[8192]{0}', space=vmem, size = 0x2000, scoped, tag = 'input window, operand 2, single buffered']
    #allocation7 [shape = 's32[1]{0}', space=sflag, size = 0x4, scoped, tag = 'scoped memory for _fused_lerp.1']
    #allocation8 [shape = 'u8[8192]{0}', space=vmem, size = 0x2000, scoped, tag = 'output window, operand 0, single buffered']
    %9 = vsyncpa [#allocation4], 0
    %10 = vsyncpa [#allocation7], 0
    %11 = vsyncpa [#allocation5], 0
    // Predicated region
    $region2: #{_fused_lerp.1} parent=1 // pred_check
      _
    $region3: #{_fused_lerp.1} parent=1 // pred_check_branch
      %13 = sbr.rel (0) target = $region5
    $region4: #{_fused_lerp.1} parent=1 // pred_region
      _
    $region5: #{_fused_lerp.1} parent=1 // pred_fallthru
      _
    // Predicated region
    $region6: #{_fused_lerp.1} parent=1 // pred_check
      _
    $region7: #{_fused_lerp.1} parent=1 // pred_check_branch
      %15 = sbr.rel (0) target = $region9
    $region8: #{_fused_lerp.1} parent=1 // pred_region
      %s17 = ssub.s32 256, 256
      %18 = vsyncadd [#allocation4], %s17
      %s19 = sshll.u32 [#allocation3], 4
      %s20 = int_to_ptr.vmem [resolvable:$true] %s19
      %25 = dma.hbm_to_vmem [thread:$0]  %s1, 256, %s20, [#allocation4], 128, 128, 8
    $region9: #{_fused_lerp.1} parent=1 // pred_fallthru
      _
    // Predicated region
    $region10: #{_fused_lerp.1} parent=1 // pred_check
      _
    $region11: #{_fused_lerp.1} parent=1 // pred_check_branch
      %27 = sbr.rel (0) target = $region13
    $region12: #{_fused_lerp.1} parent=1 // pred_region
      %s29 = ssub.s32 256, 256
      %30 = vsyncadd [#allocation7], %s29
      %s31 = sshll.u32 [#allocation6], 4
      %s32 = int_to_ptr.vmem [resolvable:$true] %s31
      %37 = dma.hbm_to_vmem [thread:$0]  %s2, 256, %s32, [#allocation7], 128, 128, 8
    $region13: #{_fused_lerp.1} parent=1 // pred_fallthru
      _
    // Predicated region
    $region14: #{_fused_lerp.1} parent=1 // pred_check
      _
    $region15: #{_fused_lerp.1} parent=1 // pred_check_branch
      %39 = sbr.rel (0) target = $region17
    $region16: #{_fused_lerp.1} parent=1 // pred_region
      %40 = dma.done [#allocation4], 256
    $region17: #{_fused_lerp.1} parent=1 // pred_fallthru
      _
    // Predicated region
    $region18: #{_fused_lerp.1} parent=1 // pred_check
      _
    $region19: #{_fused_lerp.1} parent=1 // pred_check_branch
      %42 = sbr.rel (0) target = $region21
    $region20: #{_fused_lerp.1} parent=1 // pred_region
      %43 = dma.done [#allocation7], 256
    $region21: #{_fused_lerp.1} parent=1 // pred_fallthru
      _
    %s44 = sld [smem:[#allocation2]]
    %v45 = vld [vmem:[#allocation3] sm:$0xff]
    %v46 = vld [vmem:[#allocation3 + $0x8] sm:$0xff]
    %v47 = vld [vmem:[#allocation6] sm:$0xff]
    %v48 = vld [vmem:[#allocation6 + $0x8] sm:$0xff]
    %v49 = vsub.f32 %v47, %v45
    %v50 = vsub.f32 %v48, %v46
    %v51 = vstv %s44
    %v52 = vmul.f32 %v49, %v51
    %v53 = vmul.f32 %v50, %v51
    %v54 = vadd.f32 %v45, %v52
    %v55 = vadd.f32 %v46, %v53
    %56 = vst [vmem:[#allocation8] sm:$0xff] %v54
    %57 = vst [vmem:[#allocation8 + $0x8] sm:$0xff] %v55
    // Predicated region
    $region22: #{_fused_lerp.1} parent=1 // pred_check
      _
    $region23: #{_fused_lerp.1} parent=1 // pred_check_branch
      %59 = sbr.rel (0) target = $region25
    $region24: #{_fused_lerp.1} parent=1 // pred_region
      %s61 = ssub.s32 256, 256
      %62 = vsyncadd [#allocation5], %s61
      %s63 = sshll.u32 [#allocation8], 4
      %s64 = int_to_ptr.vmem [resolvable:$true] %s63
      %69 = dma.vmem_to_hbm [thread:$0]  %s64, 256, %s3, [#allocation5], 128, 128, 8
    $region25: #{_fused_lerp.1} parent=1 // pred_fallthru
      _
    // Predicated region
    $region26: #{_fused_lerp.1} parent=1 // pred_check
      _
    $region27: #{_fused_lerp.1} parent=1 // pred_check_branch
      %71 = sbr.rel (0) target = $region29
    $region28: #{_fused_lerp.1} parent=1 // pred_region
      %72 = dma.done [#allocation5], 256
    $region29: #{_fused_lerp.1} parent=1 // pred_fallthru
      _
    %73 = vsyncpa [#allocation4], 1
    %74 = vsyncpa [#allocation7], 1
    %75 = vsyncpa [#allocation5], 1

</llo_original>
